<compile_context>
chip_gen: v6e
topology: v6e:2x2x1
jax: 0.10.0
libtpu: 0.0.40
codegen_flags: <defaults>
</compile_context>

<pallas_src>
import functools

import jax
import jax.numpy as jnp
from jax import lax
from jax.experimental import pallas as pl
from jax.experimental.pallas import tpu as pltpu


def _round_up(x, m):
    return ((x + m - 1) // m) * m


def _inter_pos_embedding_kernel(mu_ref, dg_ref, out_ref, a_ref, e_ref, r_ref,
                                *, n_freqs, d, out_dim, chunk):
    """One grid step = one tile of `tn` rays.

    mu_ref / dg_ref : (tn // chunk, d, chunk)  ray chunks, d rows x ray lanes
    out_ref         : (tn, out_dim)            final PyTorch concat layout
    a_ref, e_ref    : (2d, chunk) VMEM         freq-stacked sin / exp arguments
    r_ref           : (r_rows, chunk) VMEM     per-chunk result, feature rows x ray lanes
    """
    d2 = 2 * d
    n_pairs = n_freqs // 2
    r_rows = r_ref.shape[0]
    n_chunks = out_ref.shape[0] // chunk

    # Rows >= out_dim are never written below; zero them once per block so the
    # transpose reads defined data (they are sliced away before the store).
    if r_rows > out_dim:
        r_ref[out_dim:, :] = jnp.zeros((r_rows - out_dim, chunk), jnp.float32)

    def do_chunk(j, carry):
        mu = mu_ref[j]                       # (d, chunk)
        dg = dg_ref[j]                       # (d, chunk)

        # Stack two frequency-scaled copies along sublanes so the sin/cos/exp
        # chain runs at 2d/8 vreg occupancy (75% for d=3) instead of d/8.
        # All scales are exact powers of two -> arguments are bit-identical to
        # the reference's  freq*mu  and  -0.5*freq^2*diagE.
        a_ref[0:d, :] = mu
        a_ref[d:d2, :] = 2.0 * mu
        e_ref[0:d, :] = -0.5 * dg
        e_ref[d:d2, :] = -2.0 * dg
        args = a_ref[...]                    # (2d, chunk)
        eargs = e_ref[...]                   # (2d, chunk)

        for t in range(n_pairs):             # compile-time unrolled
            fm = (4.0 ** t) * args           # rows 0:d -> f_{2t}*mu, rows d:2d -> f_{2t+1}*mu
            w = jnp.exp((16.0 ** t) * eargs)  # exp(-0.5*f^2*diagE) on the EUP
            s = jnp.sin(fm) * w
            c = jnp.cos(fm) * w
            base = 4 * d * t
            r_ref[base:base + d, :] = s[0:d]
            r_ref[base + d:base + 2 * d, :] = c[0:d]
            r_ref[base + 2 * d:base + 3 * d, :] = s[d:d2]
            r_ref[base + 3 * d:base + 4 * d, :] = c[d:d2]

        if n_freqs % 2:                       # odd N_freqs tail
            k = n_freqs - 1
            fm = (2.0 ** k) * args[0:d]
            w = jnp.exp((4.0 ** k) * eargs[0:d])
            base = 2 * d * k
            r_ref[base:base + d, :] = jnp.sin(fm) * w
            r_ref[base + d:base + 2 * d, :] = jnp.cos(fm) * w

        # (features, rays) -> (rays, features) on the XLU, then store this
        # chunk's rows of the output block directly in the final concat layout.
        rt = jnp.transpose(r_ref[...])        # (chunk, r_rows)
        row0 = pl.multiple_of(j * chunk, chunk)
        out_ref[pl.ds(row0, chunk), :] = rt[:, :out_dim]
        return carry

    lax.fori_loop(0, n_chunks, do_chunk, 0)


def inter_pos_embedding(mu, diagE, *, n_freqs=10, row_block=8192, chunk=128):
    """JAX/Pallas equivalent of InterPosEmbedding(N_freqs=n_freqs)(mu, diagE)."""
    assert mu.shape == diagE.shape
    assert row_block % chunk == 0 and chunk % 128 == 0
    orig_shape = mu.shape
    d = int(orig_shape[-1])
    out_dim = 2 * n_freqs * d

    n = 1
    for s in orig_shape[:-1]:
        n *= int(s)

    mu2 = mu.reshape(n, d).astype(jnp.float32)
    dg2 = diagE.reshape(n, d).astype(jnp.float32)

    # Ray tiling: `chunk` rays per in-kernel step (keeps intermediates in
    # vregs), `tn` rays per grid step (amortizes per-step pipeline overhead).
    tn = max(chunk, min(row_block, _round_up(n, chunk)))
    n_pad = _round_up(n, tn)
    n_chunks_total = n_pad // chunk
    grid = n_pad // tn

    # Lay the (tiny) inputs out as (chunk-index, d, chunk); each in-kernel step
    # reads one lane-dense (d, chunk) slab.  This is ~20x less data than the
    # output, so this wrapper-side pad/relayout is cheap.
    def to_chunks(x):
        x = jnp.pad(x, ((0, n_pad - n), (0, 0)))
        return x.reshape(n_chunks_total, chunk, d).transpose(0, 2, 1)

    mu_c = to_chunks(mu2)
    dg_c = to_chunks(dg2)

    r_rows = _round_up(out_dim, 128)

    kernel = functools.partial(
        _inter_pos_embedding_kernel,
        n_freqs=n_freqs, d=d, out_dim=out_dim, chunk=chunk)

    cost = pl.CostEstimate(
        flops=12 * n_freqs * d * n,
        transcendentals=3 * n_freqs * d * n,
        bytes_accessed=4 * n * (4 * d + out_dim),
    )

    out = pl.pallas_call(
        kernel,
        out_shape=jax.ShapeDtypeStruct((n, out_dim), jnp.float32),
        grid_spec=pltpu.PrefetchScalarGridSpec(
            num_scalar_prefetch=0,
            grid=(grid,),
            in_specs=[
                pl.BlockSpec((tn // chunk, d, chunk), lambda i: (i, 0, 0)),
                pl.BlockSpec((tn // chunk, d, chunk), lambda i: (i, 0, 0)),
            ],
            out_specs=pl.BlockSpec((tn, out_dim), lambda i: (i, 0)),
            scratch_shapes=[
                pltpu.VMEM((2 * d, chunk), jnp.float32),
                pltpu.VMEM((2 * d, chunk), jnp.float32),
                pltpu.VMEM((r_rows, chunk), jnp.float32),
            ],
        ),
        compiler_params=pltpu.CompilerParams(
            # TODO(synk): on v7x consider pltpu.CORE_PARALLEL here to force the
            # ray axis to split across the two TensorCores.
            dimension_semantics=("parallel",),
            vmem_limit_bytes=32 * 1024 * 1024,
        ),
        cost_estimate=cost,
    )(mu_c, dg_c)

    return out.reshape(*orig_shape[:-1], out_dim)


def _reference(mu, diagE, n_freqs=10):
    """Pure-JAX reference mirroring the PyTorch loop structure."""
    outs = []
    for i in range(n_freqs):
        f = 2.0 ** i
        w = jnp.exp(-0.5 * (f * f) * diagE)
        outs.append(jnp.sin(f * mu) * w)
        outs.append(jnp.cos(f * mu) * w)
    return jnp.concatenate(outs, axis=-1)


if __name__ == "__main__":
    key = jax.random.PRNGKey(0)
    k1, k2 = jax.random.split(key)

    # Small shapes consistent with a NeRF positional-embedding call:
    # a batch of 2 x 8 rays, 3-D positions / 3-D diagonal covariances.
    mu = jax.random.normal(k1, (2, 8, 3), dtype=jnp.float32)
    diagE = jax.random.uniform(k2, (2, 8, 3), dtype=jnp.float32)  # nonneg variances

    out = inter_pos_embedding(mu, diagE, n_freqs=10)
    out = jax.block_until_ready(out)

    ref = _reference(mu, diagE, n_freqs=10)
    assert out.shape == (2, 8, 60), out.shape
    assert jnp.allclose(out, ref, atol=1e-5, rtol=1e-5), "mismatch vs reference"

    # Larger, non-multiple-of-tile shape: exercises multi-chunk + partial-block path.
    k3, k4 = jax.random.split(k2)
    mu_big = jax.random.normal(k3, (3, 1000, 3), dtype=jnp.float32)
    diag_big = jax.random.uniform(k4, (3, 1000, 3), dtype=jnp.float32)
    out_big = jax.block_until_ready(inter_pos_embedding(mu_big, diag_big))
    ref_big = _reference(mu_big, diag_big)
    assert out_big.shape == (3, 1000, 60), out_big.shape
    assert jnp.allclose(out_big, ref_big, atol=1e-5, rtol=1e-5), "big mismatch"

    print("KERNEL_OK")
</pallas_src>

<mosaic_0001>
module attributes {stable_mosaic.version = 11 : i64} {
  func.func @_inter_pos_embedding_kernel(%arg0: i32, %arg1: memref<1x3x128xf32, #tpu.memory_space<vmem>>, %arg2: memref<1x3x128xf32, #tpu.memory_space<vmem>>, %arg3: memref<128x60xf32, #tpu.memory_space<vmem>>, %arg4: memref<6x128xf32, #tpu.memory_space<vmem>>, %arg5: memref<6x128xf32, #tpu.memory_space<vmem>>, %arg6: memref<128x128xf32, #tpu.memory_space<vmem>>) attributes {dimension_semantics = [#tpu.dimension_semantics<parallel>], iteration_bounds = array<i64: 1>, scalar_prefetch = 0 : i64, scratch_operands = 3 : i64, tpu.core_type = #tpu.core_type<tc>, window_params = [{transform_indices = @transform_0, window_bounds = array<i64: 1, 3, 128>}, {transform_indices = @transform_1, window_bounds = array<i64: 1, 3, 128>}, {transform_indices = @transform_2, window_bounds = array<i64: 128, 60>}]} {
    %cst = arith.constant 0.000000e+00 : f32
    %0 = vector.broadcast %cst : f32 to vector<68x128xf32>
    %c60 = arith.constant 60 : index
    %c0 = arith.constant 0 : index
    %1 = vector.load %arg6[%c60, %c0] : memref<128x128xf32, #tpu.memory_space<vmem>>, vector<68x128xf32>
    tpu.vector_store %arg6[%c60, %c0], %0 {strides = array<i32>} : memref<128x128xf32, #tpu.memory_space<vmem>>, vector<68x128xf32>,
    %c0_i32 = arith.constant 0 : i32
    %2 = arith.index_cast %c0_i32 : i32 to index
    %c0_0 = arith.constant 0 : index
    %c0_1 = arith.constant 0 : index
    %3 = vector.load %arg1[%2, %c0_0, %c0_1] : memref<1x3x128xf32, #tpu.memory_space<vmem>>, vector<1x3x128xf32>
    %4 = vector.shape_cast %3 : vector<1x3x128xf32> to vector<3x128xf32>
    %5 = arith.index_cast %c0_i32 : i32 to index
    %c0_2 = arith.constant 0 : index
    %c0_3 = arith.constant 0 : index
    %6 = vector.load %arg2[%5, %c0_2, %c0_3] : memref<1x3x128xf32, #tpu.memory_space<vmem>>, vector<1x3x128xf32>
    %7 = vector.shape_cast %6 : vector<1x3x128xf32> to vector<3x128xf32>
    %c0_4 = arith.constant 0 : index
    %c0_5 = arith.constant 0 : index
    %8 = vector.load %arg4[%c0_4, %c0_5] : memref<6x128xf32, #tpu.memory_space<vmem>>, vector<3x128xf32>
    tpu.vector_store %arg4[%c0_4, %c0_5], %4 {strides = array<i32>} : memref<6x128xf32, #tpu.memory_space<vmem>>, vector<3x128xf32>,
    %cst_6 = arith.constant 2.000000e+00 : f32
    %9 = vector.broadcast %cst_6 : f32 to vector<3x128xf32>
    %10 = arith.mulf %9, %4 : vector<3x128xf32>
    %c3 = arith.constant 3 : index
    %c0_7 = arith.constant 0 : index
    %11 = vector.load %arg4[%c3, %c0_7] : memref<6x128xf32, #tpu.memory_space<vmem>>, vector<3x128xf32>
    tpu.vector_store %arg4[%c3, %c0_7], %10 {strides = array<i32>} : memref<6x128xf32, #tpu.memory_space<vmem>>, vector<3x128xf32>,
    %cst_8 = arith.constant -5.000000e-01 : f32
    %12 = vector.broadcast %cst_8 : f32 to vector<3x128xf32>
    %13 = arith.mulf %12, %7 : vector<3x128xf32>
    %c0_9 = arith.constant 0 : index
    %c0_10 = arith.constant 0 : index
    %14 = vector.load %arg5[%c0_9, %c0_10] : memref<6x128xf32, #tpu.memory_space<vmem>>, vector<3x128xf32>
    tpu.vector_store %arg5[%c0_9, %c0_10], %13 {strides = array<i32>} : memref<6x128xf32, #tpu.memory_space<vmem>>, vector<3x128xf32>,
    %cst_11 = arith.constant -2.000000e+00 : f32
    %15 = vector.broadcast %cst_11 : f32 to vector<3x128xf32>
    %16 = arith.mulf %15, %7 : vector<3x128xf32>
    %c3_12 = arith.constant 3 : index
    %c0_13 = arith.constant 0 : index
    %17 = vector.load %arg5[%c3_12, %c0_13] : memref<6x128xf32, #tpu.memory_space<vmem>>, vector<3x128xf32>
    tpu.vector_store %arg5[%c3_12, %c0_13], %16 {strides = array<i32>} : memref<6x128xf32, #tpu.memory_space<vmem>>, vector<3x128xf32>,
    %c0_14 = arith.constant 0 : index
    %c0_15 = arith.constant 0 : index
    %18 = vector.load %arg4[%c0_14, %c0_15] : memref<6x128xf32, #tpu.memory_space<vmem>>, vector<6x128xf32>
    %c0_16 = arith.constant 0 : index
    %c0_17 = arith.constant 0 : index
    %19 = vector.load %arg5[%c0_16, %c0_17] : memref<6x128xf32, #tpu.memory_space<vmem>>, vector<6x128xf32>
    %cst_18 = arith.constant 1.000000e+00 : f32
    %20 = vector.broadcast %cst_18 : f32 to vector<6x128xf32>
    %21 = arith.mulf %20, %18 : vector<6x128xf32>
    %cst_19 = arith.constant 1.000000e+00 : f32
    %22 = vector.broadcast %cst_19 : f32 to vector<6x128xf32>
    %23 = arith.mulf %22, %19 : vector<6x128xf32>
    %24 = math.exp %23 : vector<6x128xf32>
    %25 = math.sin %21 : vector<6x128xf32>
    %26 = arith.mulf %25, %24 : vector<6x128xf32>
    %27 = math.cos %21 : vector<6x128xf32>
    %28 = arith.mulf %27, %24 : vector<6x128xf32>
    %29 = vector.extract_strided_slice %26 {offsets = [0, 0], sizes = [3, 128], strides = [1, 1]} : vector<6x128xf32> to vector<3x128xf32>
    %c0_20 = arith.constant 0 : index
    %c0_21 = arith.constant 0 : index
    %30 = vector.load %arg6[%c0_20, %c0_21] : memref<128x128xf32, #tpu.memory_space<vmem>>, vector<3x128xf32>
    tpu.vector_store %arg6[%c0_20, %c0_21], %29 {strides = array<i32>} : memref<128x128xf32, #tpu.memory_space<vmem>>, vector<3x128xf32>,
    %31 = vector.extract_strided_slice %28 {offsets = [0, 0], sizes = [3, 128], strides = [1, 1]} : vector<6x128xf32> to vector<3x128xf32>
    %c3_22 = arith.constant 3 : index
    %c0_23 = arith.constant 0 : index
    %32 = vector.load %arg6[%c3_22, %c0_23] : memref<128x128xf32, #tpu.memory_space<vmem>>, vector<3x128xf32>
    tpu.vector_store %arg6[%c3_22, %c0_23], %31 {strides = array<i32>} : memref<128x128xf32, #tpu.memory_space<vmem>>, vector<3x128xf32>,
    %33 = vector.extract_strided_slice %26 {offsets = [3, 0], sizes = [3, 128], strides = [1, 1]} : vector<6x128xf32> to vector<3x128xf32>
    %c6 = arith.constant 6 : index
    %c0_24 = arith.constant 0 : index
    %34 = vector.load %arg6[%c6, %c0_24] : memref<128x128xf32, #tpu.memory_space<vmem>>, vector<3x128xf32>
    tpu.vector_store %arg6[%c6, %c0_24], %33 {strides = array<i32>} : memref<128x128xf32, #tpu.memory_space<vmem>>, vector<3x128xf32>,
    %35 = vector.extract_strided_slice %28 {offsets = [3, 0], sizes = [3, 128], strides = [1, 1]} : vector<6x128xf32> to vector<3x128xf32>
    %c9 = arith.constant 9 : index
    %c0_25 = arith.constant 0 : index
    %36 = vector.load %arg6[%c9, %c0_25] : memref<128x128xf32, #tpu.memory_space<vmem>>, vector<3x128xf32>
    tpu.vector_store %arg6[%c9, %c0_25], %35 {strides = array<i32>} : memref<128x128xf32, #tpu.memory_space<vmem>>, vector<3x128xf32>,
    %cst_26 = arith.constant 4.000000e+00 : f32
    %37 = vector.broadcast %cst_26 : f32 to vector<6x128xf32>
    %38 = arith.mulf %37, %18 : vector<6x128xf32>
    %cst_27 = arith.constant 1.600000e+01 : f32
    %39 = vector.broadcast %cst_27 : f32 to vector<6x128xf32>
    %40 = arith.mulf %39, %19 : vector<6x128xf32>
    %41 = math.exp %40 : vector<6x128xf32>
    %42 = math.sin %38 : vector<6x128xf32>
    %43 = arith.mulf %42, %41 : vector<6x128xf32>
    %44 = math.cos %38 : vector<6x128xf32>
    %45 = arith.mulf %44, %41 : vector<6x128xf32>
    %46 = vector.extract_strided_slice %43 {offsets = [0, 0], sizes = [3, 128], strides = [1, 1]} : vector<6x128xf32> to vector<3x128xf32>
    %c12 = arith.constant 12 : index
    %c0_28 = arith.constant 0 : index
    %47 = vector.load %arg6[%c12, %c0_28] : memref<128x128xf32, #tpu.memory_space<vmem>>, vector<3x128xf32>
    tpu.vector_store %arg6[%c12, %c0_28], %46 {strides = array<i32>} : memref<128x128xf32, #tpu.memory_space<vmem>>, vector<3x128xf32>,
    %48 = vector.extract_strided_slice %45 {offsets = [0, 0], sizes = [3, 128], strides = [1, 1]} : vector<6x128xf32> to vector<3x128xf32>
    %c15 = arith.constant 15 : index
    %c0_29 = arith.constant 0 : index
    %49 = vector.load %arg6[%c15, %c0_29] : memref<128x128xf32, #tpu.memory_space<vmem>>, vector<3x128xf32>
    tpu.vector_store %arg6[%c15, %c0_29], %48 {strides = array<i32>} : memref<128x128xf32, #tpu.memory_space<vmem>>, vector<3x128xf32>,
    %50 = vector.extract_strided_slice %43 {offsets = [3, 0], sizes = [3, 128], strides = [1, 1]} : vector<6x128xf32> to vector<3x128xf32>
    %c18 = arith.constant 18 : index
    %c0_30 = arith.constant 0 : index
    %51 = vector.load %arg6[%c18, %c0_30] : memref<128x128xf32, #tpu.memory_space<vmem>>, vector<3x128xf32>
    tpu.vector_store %arg6[%c18, %c0_30], %50 {strides = array<i32>} : memref<128x128xf32, #tpu.memory_space<vmem>>, vector<3x128xf32>,
    %52 = vector.extract_strided_slice %45 {offsets = [3, 0], sizes = [3, 128], strides = [1, 1]} : vector<6x128xf32> to vector<3x128xf32>
    %c21 = arith.constant 21 : index
    %c0_31 = arith.constant 0 : index
    %53 = vector.load %arg6[%c21, %c0_31] : memref<128x128xf32, #tpu.memory_space<vmem>>, vector<3x128xf32>
    tpu.vector_store %arg6[%c21, %c0_31], %52 {strides = array<i32>} : memref<128x128xf32, #tpu.memory_space<vmem>>, vector<3x128xf32>,
    %cst_32 = arith.constant 1.600000e+01 : f32
    %54 = vector.broadcast %cst_32 : f32 to vector<6x128xf32>
    %55 = arith.mulf %54, %18 : vector<6x128xf32>
    %cst_33 = arith.constant 2.560000e+02 : f32
    %56 = vector.broadcast %cst_33 : f32 to vector<6x128xf32>
    %57 = arith.mulf %56, %19 : vector<6x128xf32>
    %58 = math.exp %57 : vector<6x128xf32>
    %59 = math.sin %55 : vector<6x128xf32>
    %60 = arith.mulf %59, %58 : vector<6x128xf32>
    %61 = math.cos %55 : vector<6x128xf32>
    %62 = arith.mulf %61, %58 : vector<6x128xf32>
    %63 = vector.extract_strided_slice %60 {offsets = [0, 0], sizes = [3, 128], strides = [1, 1]} : vector<6x128xf32> to vector<3x128xf32>
    %c24 = arith.constant 24 : index
    %c0_34 = arith.constant 0 : index
    %64 = vector.load %arg6[%c24, %c0_34] : memref<128x128xf32, #tpu.memory_space<vmem>>, vector<3x128xf32>
    tpu.vector_store %arg6[%c24, %c0_34], %63 {strides = array<i32>} : memref<128x128xf32, #tpu.memory_space<vmem>>, vector<3x128xf32>,
    %65 = vector.extract_strided_slice %62 {offsets = [0, 0], sizes = [3, 128], strides = [1, 1]} : vector<6x128xf32> to vector<3x128xf32>
    %c27 = arith.constant 27 : index
    %c0_35 = arith.constant 0 : index
    %66 = vector.load %arg6[%c27, %c0_35] : memref<128x128xf32, #tpu.memory_space<vmem>>, vector<3x128xf32>
    tpu.vector_store %arg6[%c27, %c0_35], %65 {strides = array<i32>} : memref<128x128xf32, #tpu.memory_space<vmem>>, vector<3x128xf32>,
    %67 = vector.extract_strided_slice %60 {offsets = [3, 0], sizes = [3, 128], strides = [1, 1]} : vector<6x128xf32> to vector<3x128xf32>
    %c30 = arith.constant 30 : index
    %c0_36 = arith.constant 0 : index
    %68 = vector.load %arg6[%c30, %c0_36] : memref<128x128xf32, #tpu.memory_space<vmem>>, vector<3x128xf32>
    tpu.vector_store %arg6[%c30, %c0_36], %67 {strides = array<i32>} : memref<128x128xf32, #tpu.memory_space<vmem>>, vector<3x128xf32>,
    %69 = vector.extract_strided_slice %62 {offsets = [3, 0], sizes = [3, 128], strides = [1, 1]} : vector<6x128xf32> to vector<3x128xf32>
    %c33 = arith.constant 33 : index
    %c0_37 = arith.constant 0 : index
    %70 = vector.load %arg6[%c33, %c0_37] : memref<128x128xf32, #tpu.memory_space<vmem>>, vector<3x128xf32>
    tpu.vector_store %arg6[%c33, %c0_37], %69 {strides = array<i32>} : memref<128x128xf32, #tpu.memory_space<vmem>>, vector<3x128xf32>,
    %cst_38 = arith.constant 6.400000e+01 : f32
    %71 = vector.broadcast %cst_38 : f32 to vector<6x128xf32>
    %72 = arith.mulf %71, %18 : vector<6x128xf32>
    %cst_39 = arith.constant 4.096000e+03 : f32
    %73 = vector.broadcast %cst_39 : f32 to vector<6x128xf32>
    %74 = arith.mulf %73, %19 : vector<6x128xf32>
    %75 = math.exp %74 : vector<6x128xf32>
    %76 = math.sin %72 : vector<6x128xf32>
    %77 = arith.mulf %76, %75 : vector<6x128xf32>
    %78 = math.cos %72 : vector<6x128xf32>
    %79 = arith.mulf %78, %75 : vector<6x128xf32>
    %80 = vector.extract_strided_slice %77 {offsets = [0, 0], sizes = [3, 128], strides = [1, 1]} : vector<6x128xf32> to vector<3x128xf32>
    %c36 = arith.constant 36 : index
    %c0_40 = arith.constant 0 : index
    %81 = vector.load %arg6[%c36, %c0_40] : memref<128x128xf32, #tpu.memory_space<vmem>>, vector<3x128xf32>
    tpu.vector_store %arg6[%c36, %c0_40], %80 {strides = array<i32>} : memref<128x128xf32, #tpu.memory_space<vmem>>, vector<3x128xf32>,
    %82 = vector.extract_strided_slice %79 {offsets = [0, 0], sizes = [3, 128], strides = [1, 1]} : vector<6x128xf32> to vector<3x128xf32>
    %c39 = arith.constant 39 : index
    %c0_41 = arith.constant 0 : index
    %83 = vector.load %arg6[%c39, %c0_41] : memref<128x128xf32, #tpu.memory_space<vmem>>, vector<3x128xf32>
    tpu.vector_store %arg6[%c39, %c0_41], %82 {strides = array<i32>} : memref<128x128xf32, #tpu.memory_space<vmem>>, vector<3x128xf32>,
    %84 = vector.extract_strided_slice %77 {offsets = [3, 0], sizes = [3, 128], strides = [1, 1]} : vector<6x128xf32> to vector<3x128xf32>
    %c42 = arith.constant 42 : index
    %c0_42 = arith.constant 0 : index
    %85 = vector.load %arg6[%c42, %c0_42] : memref<128x128xf32, #tpu.memory_space<vmem>>, vector<3x128xf32>
    tpu.vector_store %arg6[%c42, %c0_42], %84 {strides = array<i32>} : memref<128x128xf32, #tpu.memory_space<vmem>>, vector<3x128xf32>,
    %86 = vector.extract_strided_slice %79 {offsets = [3, 0], sizes = [3, 128], strides = [1, 1]} : vector<6x128xf32> to vector<3x128xf32>
    %c45 = arith.constant 45 : index
    %c0_43 = arith.constant 0 : index
    %87 = vector.load %arg6[%c45, %c0_43] : memref<128x128xf32, #tpu.memory_space<vmem>>, vector<3x128xf32>
    tpu.vector_store %arg6[%c45, %c0_43], %86 {strides = array<i32>} : memref<128x128xf32, #tpu.memory_space<vmem>>, vector<3x128xf32>,
    %cst_44 = arith.constant 2.560000e+02 : f32
    %88 = vector.broadcast %cst_44 : f32 to vector<6x128xf32>
    %89 = arith.mulf %88, %18 : vector<6x128xf32>
    %cst_45 = arith.constant 6.553600e+04 : f32
    %90 = vector.broadcast %cst_45 : f32 to vector<6x128xf32>
    %91 = arith.mulf %90, %19 : vector<6x128xf32>
    %92 = math.exp %91 : vector<6x128xf32>
    %93 = math.sin %89 : vector<6x128xf32>
    %94 = arith.mulf %93, %92 : vector<6x128xf32>
    %95 = math.cos %89 : vector<6x128xf32>
    %96 = arith.mulf %95, %92 : vector<6x128xf32>
    %97 = vector.extract_strided_slice %94 {offsets = [0, 0], sizes = [3, 128], strides = [1, 1]} : vector<6x128xf32> to vector<3x128xf32>
    %c48 = arith.constant 48 : index
    %c0_46 = arith.constant 0 : index
    %98 = vector.load %arg6[%c48, %c0_46] : memref<128x128xf32, #tpu.memory_space<vmem>>, vector<3x128xf32>
    tpu.vector_store %arg6[%c48, %c0_46], %97 {strides = array<i32>} : memref<128x128xf32, #tpu.memory_space<vmem>>, vector<3x128xf32>,
    %99 = vector.extract_strided_slice %96 {offsets = [0, 0], sizes = [3, 128], strides = [1, 1]} : vector<6x128xf32> to vector<3x128xf32>
    %c51 = arith.constant 51 : index
    %c0_47 = arith.constant 0 : index
    %100 = vector.load %arg6[%c51, %c0_47] : memref<128x128xf32, #tpu.memory_space<vmem>>, vector<3x128xf32>
    tpu.vector_store %arg6[%c51, %c0_47], %99 {strides = array<i32>} : memref<128x128xf32, #tpu.memory_space<vmem>>, vector<3x128xf32>,
    %101 = vector.extract_strided_slice %94 {offsets = [3, 0], sizes = [3, 128], strides = [1, 1]} : vector<6x128xf32> to vector<3x128xf32>
    %c54 = arith.constant 54 : index
    %c0_48 = arith.constant 0 : index
    %102 = vector.load %arg6[%c54, %c0_48] : memref<128x128xf32, #tpu.memory_space<vmem>>, vector<3x128xf32>
    tpu.vector_store %arg6[%c54, %c0_48], %101 {strides = array<i32>} : memref<128x128xf32, #tpu.memory_space<vmem>>, vector<3x128xf32>,
    %103 = vector.extract_strided_slice %96 {offsets = [3, 0], sizes = [3, 128], strides = [1, 1]} : vector<6x128xf32> to vector<3x128xf32>
    %c57 = arith.constant 57 : index
    %c0_49 = arith.constant 0 : index
    %104 = vector.load %arg6[%c57, %c0_49] : memref<128x128xf32, #tpu.memory_space<vmem>>, vector<3x128xf32>
    tpu.vector_store %arg6[%c57, %c0_49], %103 {strides = array<i32>} : memref<128x128xf32, #tpu.memory_space<vmem>>, vector<3x128xf32>,
    %c0_50 = arith.constant 0 : index
    %c0_51 = arith.constant 0 : index
    %105 = vector.load %arg6[%c0_50, %c0_51] : memref<128x128xf32, #tpu.memory_space<vmem>>, vector<128x128xf32>
    %106 = tpu.transpose %105, [1, 0] : vector<128x128xf32> -> vector<128x128xf32>
    %c128_i32 = arith.constant 128 : i32
    %107 = arith.muli %c0_i32, %c128_i32 : i32
    %108 = tpu.assume_multiple %107, 128 : i32
    %109 = vector.extract_strided_slice %106 {offsets = [0, 0], sizes = [128, 60], strides = [1, 1]} : vector<128x128xf32> to vector<128x60xf32>
    %110 = arith.index_cast %108 : i32 to index
    %c0_52 = arith.constant 0 : index
    %111 = vector.load %arg3[%110, %c0_52] : memref<128x60xf32, #tpu.memory_space<vmem>>, vector<128x60xf32>
    tpu.vector_store %arg3[%110, %c0_52], %109 {strides = array<i32>} : memref<128x60xf32, #tpu.memory_space<vmem>>, vector<128x60xf32>,
    %c1_i32 = arith.constant 1 : i32
    return
  }
  func.func @transform_0(%arg0: i32) -> (i32, i32, i32) {
    %c0_i32 = arith.constant 0 : i32
    %c0_i32_0 = arith.constant 0 : i32
    %c0_i32_1 = arith.constant 0 : i32
    return %arg0, %c0_i32, %c0_i32_0 : i32, i32, i32
  }
  func.func @transform_1(%arg0: i32) -> (i32, i32, i32) {
    %c0_i32 = arith.constant 0 : i32
    %c0_i32_0 = arith.constant 0 : i32
    %c0_i32_1 = arith.constant 0 : i32
    return %arg0, %c0_i32, %c0_i32_0 : i32, i32, i32
  }
  func.func @transform_2(%arg0: i32) -> (i32, i32) {
    %c0_i32 = arith.constant 0 : i32
    %c0_i32_0 = arith.constant 0 : i32
    return %arg0, %c0_i32 : i32, i32
  }
}

</mosaic_0001>

<llo_original>
// kernel: tpu_custom_call.1
$region0: #{tpu_custom_call.1}
  #allocation0 [shape = 'u32[]', space=smem, size = 0x4, offset = 0x4, fixed_abs, tag = 'smem constant byte address 0x4 - core index']
  #allocation1 [shape = 'u32[144,128]{1,0:T(1,128)}', space=vmem, size = 0x12000, scoped, tag = 'internal scratch']
  #allocation2 [shape = 'f32[6,128]{1,0:T(8,128)}', space=vmem, size = 0x1000, scoped, tag = 'scratch operand']
  #allocation3 [shape = 'f32[6,128]{1,0:T(8,128)}', space=vmem, size = 0x1000, scoped, tag = 'scratch operand']
  #allocation4 [shape = 'f32[128,128]{1,0:T(8,128)}', space=vmem, size = 0x10000, scoped, tag = 'scratch operand']
  %s0 = inlined_call_operand.vmem [shape: f32[1,3,128], index: 0, kind: input, shape index: {}]
  %s1 = inlined_call_operand.vmem [shape: f32[1,3,128], index: 1, kind: input, shape index: {}]
  %s2 = inlined_call_operand.hbm [shape: f32[16,60], index: 2, kind: output, shape index: {}]
  %s3 = sld [smem:[#allocation0]]
  $region18: #{tpu_custom_call.1} parent=0
    _
  %s5 = ssub.s32 1, %s3
  %s6 = scalar_select 0, %s5, %s3
  $region1: #{tpu_custom_call.1} parent=0
    #allocation5 [shape = 'u8[65536]{0}', space=vmem, size = 0x10000, scoped, tag = 'output window, operand 0, single buffered']
    #allocation6 [shape = 's32[1]{0}', space=sflag, size = 0x4, scoped, tag = 'scoped memory for tpu_custom_call.1']
    %7 = vsyncpa [#allocation6], 0
    // Predicated region
    $region2: #{tpu_custom_call.1} parent=1 // pred_check
      _
    $region3: #{tpu_custom_call.1} parent=1 // pred_check_branch
      %9 = sbr.rel (0) target = $region5
    $region4: #{tpu_custom_call.1} parent=1 // pred_region
      _
    $region5: #{tpu_custom_call.1} parent=1 // pred_fallthru
      _
    // Predicated region
    $region6: #{tpu_custom_call.1} parent=1 // pred_check
      _
    $region7: #{tpu_custom_call.1} parent=1 // pred_check_branch
      %11 = sbr.rel (0) target = $region9
    $region8: #{tpu_custom_call.1} parent=1 // pred_region
      _
    $region9: #{tpu_custom_call.1} parent=1 // pred_fallthru
      _
    %12 = vst [vmem:[#allocation4 + $0x3c] sm:$0xff] 0.0
    %13 = vst [vmem:[#allocation4 + $0x44] sm:$0xff] 0.0
    %14 = vst [vmem:[#allocation4 + $0x4c] sm:$0xff] 0.0
    %15 = vst [vmem:[#allocation4 + $0x54] sm:$0xff] 0.0
    %16 = vst [vmem:[#allocation4 + $0x5c] sm:$0xff] 0.0
    %17 = vst [vmem:[#allocation4 + $0x64] sm:$0xff] 0.0
    %18 = vst [vmem:[#allocation4 + $0x6c] sm:$0xff] 0.0
    %19 = vst [vmem:[#allocation4 + $0x74] sm:$0xff] 0.0
    %20 = vst [vmem:[#allocation4 + $0x7c] sm:$0xf] 0.0
    %v21 = vld [vmem:[%s0] sm:$0x7]
    %v22 = vld [vmem:[%s1] sm:$0x7]
    %23 = vst [vmem:[#allocation2] sm:$0x7] %v21
    %v24 = vmul.f32 %v21, 2.0
    %25 = vst [vmem:[#allocation2 + $0x3] sm:$0x7] %v24
    %v26 = vmul.f32 %v22, -0.5
    %27 = vst [vmem:[#allocation3] sm:$0x7] %v26
    %v28 = vmul.f32 %v22, -2.0
    %29 = vst [vmem:[#allocation3 + $0x3] sm:$0x7] %v28
    %v30 = vld [vmem:[#allocation2] sm:$0x3f]
    %v31 = vld [vmem:[#allocation3] sm:$0x3f]
    %v32 = vmul.f32 %v31, 1.442695
    %v33 = vpow.pop %v32
    %v34 = vand.u32 2147483647, %v30
    %vm35 = vcmp.le.f32.partialorder %v34, 0.7853982
    %vm36 = vcmp.lt.s32.totalorder %v30, 0
    %v37 = vand.u32 %v30, 2139095040
    %v38 = vshrl.u32 %v37, 23
    %v39 = vsub.s32 %v38, 127
    %v40 = vand.u32 2147483647, %v30
    %v41 = vand.u32 %v40, 8388607
    %v42 = vor.u32 %v41, 8388608
    %v43 = vsub.s32 0, %v42
    %v44 = vadd.s32 %v39, 1
    %vm45 = vcmp.gt.s32.totalorder %v44, 0
    %v46 = vsel %vm45, %v44, 0
    %v47 = vshrl.u32 %v46, 5
    %v48 = vand.u32 %v46, 31
    %v49 = vsub.s32 32, %v48
    %v50 = vshrl.u32 683565275, %v49
    %v51 = vshll.u32 683565275, %v48
    %v52 = vshrl.u32 2475754826, %v49
    %v53 = vor.u32 %v51, %v52
    %v54 = vshll.u32 2475754826, %v48
    %v55 = vshrl.u32 2131351028, %v49
    %v56 = vor.u32 %v54, %v55
    %v57 = vshll.u32 2131351028, %v48
    %v58 = vshrl.u32 2102212464, %v49
    %v59 = vor.u32 %v57, %v58
    %v60 = vshll.u32 2102212464, %v48
    %v61 = vshrl.u32 920167782, %v49
    %v62 = vor.u32 %v60, %v61
    %v63 = vshll.u32 920167782, %v48
    %v64 = vshrl.u32 1326507024, %v49
    %v65 = vor.u32 %v63, %v64
    %vm66 = vcmp.lt.s32.totalorder %v47, 1
    %vm67 = vcmp.lt.s32.totalorder %v47, 2
    %vm68 = vcmp.lt.s32.totalorder %v47, 3
    %vm69 = vcmp.lt.s32.totalorder %v47, 4
    %v70 = vsel %vm66, %v50, %v53
    %v71 = vsel %vm69, %v59, 2102212464
    %v72 = vsel %vm68, %v56, %v71
    %v73 = vsel %vm67, %v70, %v72
    %v74 = vsel %vm66, %v53, %v56
    %v75 = vsel %vm69, %v62, 920167782
    %v76 = vsel %vm68, %v59, %v75
    %v77 = vsel %vm67, %v74, %v76
    %v78 = vsel %vm66, %v56, %v59
    %v79 = vsel %vm69, %v65, 1326507024
    %v80 = vsel %vm68, %v62, %v79
    %v81 = vsel %vm67, %v78, %v80
    %v82 = vshll.u32 %v42, 8
    %v83 = vmul.u32.u64.compose %v82, %v81
    %v84 = vextract.low.u32 %v83
    %v85 = vextract.high.u32 %v83
    %v86 = vmul.u32.u64.compose %v82, %v77
    %v87 = vextract.low.u32 %v86
    %v88 = vextract.high.u32 %v86
    %v89 = vmul.u32 %v82, %v73
    %v90 = vadd.s32 %v85, %v87
    %vm91 = vc.u32 %v85, %v87
    %v92 = vadd.s32 %v88, 1
    %v93 = vsel %vm91, %v92, %v88
    %v94 = vadd.s32 %v89, %v93
    %v95 = vadd.s32 %v94, 536870912
    %v96 = vshrl.u32 %v95, 30
    %v97 = vshll.u32 %v96, 30
    %v98 = vsub.s32 %v94, %v97
    %vm99 = vcmp.lt.s32.totalorder %v98, 0
    %v100 = vsub.s32 0, %v98
    %v101 = vsel %vm99, %v100, %v98
    %v102 = vclz %v101
    %v103 = vsub.s32 %v102, 2
    %vm104 = vcmp.gt.s32.totalorder 0, %v103
    %v105 = vsel %vm104, 0, %v103
    %v106 = vsub.s32 32, %v105
    %v107 = vshll.u32 %v98, %v105
    %v108 = vshrl.u32 %v90, %v106
    %v109 = vor.u32 %v107, %v108
    %v110 = vsub.s32 4294967266, %v105
    %v111 = vadd.s32 %v110, 127
    %v112 = vshll.u32 %v111, 23
    %v113 = vor.u32 4788187, %v112
    %v114 = vand.u32 2147483647, %v113
    %v116 = vcvt.s32.f32 %v109
    %v117 = vmul.f32 %v116, %v114
    %v118 = vxor.u32 %v117, 2147483648
    %v119 = vsel %vm36, %v118, %v117
    %v120 = vsub.s32 4, %v96
    %v121 = vsel %vm36, %v120, %v96
    %v122 = vsel %vm35, %v30, %v119
    %v123 = vsel %vm35, 0, %v121
    %v124 = vcosq.f32.pop %v122
    %v125 = vsinq.f32.pop %v122
    %vm126 = vweird.f32 %v30
    %v127 = vadd.s32 %v123, 3
    %v128 = vand.u32 %v127, 3
    %vm129 = vcmp.lt.s32.totalorder %v128, 2
    %vm130 = vcmp.eq.s32.totalorder %v128, 0
    %v131 = vxor.u32 %v125, 2147483648
    %v132 = vsel %vm130, %v124, %v131
    %vm133 = vcmp.eq.s32.totalorder %v128, 2
    %v134 = vxor.u32 %v124, 2147483648
    %v135 = vsel %vm133, %v134, %v125
    %v136 = vsel %vm129, %v132, %v135
    %v137 = vsel %vm126, nan, %v136
    %v138 = vmul.f32 %v137, %v33
    %v139 = vand.u32 2147483647, %v30
    %vm140 = vcmp.le.f32.partialorder %v139, 0.7853982
    %vm141 = vcmp.lt.s32.totalorder %v30, 0
    %v142 = vand.u32 %v30, 2139095040
    %v143 = vshrl.u32 %v142, 23
    %v144 = vsub.s32 %v143, 127
    %v145 = vand.u32 2147483647, %v30
    %v146 = vand.u32 %v145, 8388607
    %v147 = vor.u32 %v146, 8388608
    %v148 = vsub.s32 0, %v147
    %v149 = vadd.s32 %v144, 1
    %vm150 = vcmp.gt.s32.totalorder %v149, 0
    %v151 = vsel %vm150, %v149, 0
    %v152 = vshrl.u32 %v151, 5
    %v153 = vand.u32 %v151, 31
    %v154 = vsub.s32 32, %v153
    %v155 = vshrl.u32 683565275, %v154
    %v156 = vshll.u32 683565275, %v153
    %v157 = vshrl.u32 2475754826, %v154
    %v158 = vor.u32 %v156, %v157
    %v159 = vshll.u32 2475754826, %v153
    %v160 = vshrl.u32 2131351028, %v154
    %v161 = vor.u32 %v159, %v160
    %v162 = vshll.u32 2131351028, %v153
    %v163 = vshrl.u32 2102212464, %v154
    %v164 = vor.u32 %v162, %v163
    %v165 = vshll.u32 2102212464, %v153
    %v166 = vshrl.u32 920167782, %v154
    %v167 = vor.u32 %v165, %v166
    %v168 = vshll.u32 920167782, %v153
    %v169 = vshrl.u32 1326507024, %v154
    %v170 = vor.u32 %v168, %v169
    %vm171 = vcmp.lt.s32.totalorder %v152, 1
    %vm172 = vcmp.lt.s32.totalorder %v152, 2
    %vm173 = vcmp.lt.s32.totalorder %v152, 3
    %vm174 = vcmp.lt.s32.totalorder %v152, 4
    %v175 = vsel %vm171, %v155, %v158
    %v176 = vsel %vm174, %v164, 2102212464
    %v177 = vsel %vm173, %v161, %v176
    %v178 = vsel %vm172, %v175, %v177
    %v179 = vsel %vm171, %v158, %v161
    %v180 = vsel %vm174, %v167, 920167782
    %v181 = vsel %vm173, %v164, %v180
    %v182 = vsel %vm172, %v179, %v181
    %v183 = vsel %vm171, %v161, %v164
    %v184 = vsel %vm174, %v170, 1326507024
    %v185 = vsel %vm173, %v167, %v184
    %v186 = vsel %vm172, %v183, %v185
    %v187 = vshll.u32 %v147, 8
    %v188 = vmul.u32.u64.compose %v187, %v186
    %v189 = vextract.low.u32 %v188
    %v190 = vextract.high.u32 %v188
    %v191 = vmul.u32.u64.compose %v187, %v182
    %v192 = vextract.low.u32 %v191
    %v193 = vextract.high.u32 %v191
    %v194 = vmul.u32 %v187, %v178
    %v195 = vadd.s32 %v190, %v192
    %vm196 = vc.u32 %v190, %v192
    %v197 = vadd.s32 %v193, 1
    %v198 = vsel %vm196, %v197, %v193
    %v199 = vadd.s32 %v194, %v198
    %v200 = vadd.s32 %v199, 536870912
    %v201 = vshrl.u32 %v200, 30
    %v202 = vshll.u32 %v201, 30
    %v203 = vsub.s32 %v199, %v202
    %vm204 = vcmp.lt.s32.totalorder %v203, 0
    %v205 = vsub.s32 0, %v203
    %v206 = vsel %vm204, %v205, %v203
    %v207 = vclz %v206
    %v208 = vsub.s32 %v207, 2
    %vm209 = vcmp.gt.s32.totalorder 0, %v208
    %v210 = vsel %vm209, 0, %v208
    %v211 = vsub.s32 32, %v210
    %v212 = vshll.u32 %v203, %v210
    %v213 = vshrl.u32 %v195, %v211
    %v214 = vor.u32 %v212, %v213
    %v215 = vsub.s32 4294967266, %v210
    %v216 = vadd.s32 %v215, 127
    %v217 = vshll.u32 %v216, 23
    %v218 = vor.u32 4788187, %v217
    %v219 = vand.u32 2147483647, %v218
    %v221 = vcvt.s32.f32 %v214
    %v222 = vmul.f32 %v221, %v219
    %v223 = vxor.u32 %v222, 2147483648
    %v224 = vsel %vm141, %v223, %v222
    %v225 = vsub.s32 4, %v201
    %v226 = vsel %vm141, %v225, %v201
    %v227 = vsel %vm140, %v30, %v224
    %v228 = vsel %vm140, 0, %v226
    %v229 = vcosq.f32.pop %v227
    %v230 = vsinq.f32.pop %v227
    %vm231 = vweird.f32 %v30
    %v232 = vand.u32 %v228, 3
    %vm233 = vcmp.lt.s32.totalorder %v232, 2
    %vm234 = vcmp.eq.s32.totalorder %v232, 0
    %v235 = vxor.u32 %v230, 2147483648
    %v236 = vsel %vm234, %v229, %v235
    %vm237 = vcmp.eq.s32.totalorder %v232, 2
    %v238 = vxor.u32 %v229, 2147483648
    %v239 = vsel %vm237, %v238, %v230
    %v240 = vsel %vm233, %v236, %v239
    %v241 = vsel %vm231, nan, %v240
    %v242 = vmul.f32 %v241, %v33
    %243 = vst [vmem:[#allocation4] sm:$0x7] %v138
    %244 = vst [vmem:[#allocation4 + $0x3] sm:$0x7] %v242
    %245 = vst [vmem:[#allocation4 + $0x3] sm:$0x38] %v138
    %246 = vst [vmem:[#allocation4 + $0x6] sm:$0x38] %v242
    %v247 = vmul.f32 %v30, 4.0
    %v248 = vmul.f32 %v31, 16.0
    %v249 = vmul.f32 %v248, 1.442695
    %v250 = vpow.pop %v249
    %v251 = vand.u32 2147483647, %v247
    %vm252 = vcmp.le.f32.partialorder %v251, 0.7853982
    %vm253 = vcmp.lt.s32.totalorder %v247, 0
    %v254 = vand.u32 %v247, 2139095040
    %v255 = vshrl.u32 %v254, 23
    %v256 = vsub.s32 %v255, 127
    %v257 = vand.u32 2147483647, %v247
    %v258 = vand.u32 %v257, 8388607
    %v259 = vor.u32 %v258, 8388608
    %v260 = vsub.s32 0, %v259
    %v261 = vadd.s32 %v256, 1
    %vm262 = vcmp.gt.s32.totalorder %v261, 0
    %v263 = vsel %vm262, %v261, 0
    %v264 = vshrl.u32 %v263, 5
    %v265 = vand.u32 %v263, 31
    %v266 = vsub.s32 32, %v265
    %v267 = vshrl.u32 683565275, %v266
    %v268 = vshll.u32 683565275, %v265
    %v269 = vshrl.u32 2475754826, %v266
    %v270 = vor.u32 %v268, %v269
    %v271 = vshll.u32 2475754826, %v265
    %v272 = vshrl.u32 2131351028, %v266
    %v273 = vor.u32 %v271, %v272
    %v274 = vshll.u32 2131351028, %v265
    %v275 = vshrl.u32 2102212464, %v266
    %v276 = vor.u32 %v274, %v275
    %v277 = vshll.u32 2102212464, %v265
    %v278 = vshrl.u32 920167782, %v266
    %v279 = vor.u32 %v277, %v278
    %v280 = vshll.u32 920167782, %v265
    %v281 = vshrl.u32 1326507024, %v266
    %v282 = vor.u32 %v280, %v281
    %vm283 = vcmp.lt.s32.totalorder %v264, 1
    %vm284 = vcmp.lt.s32.totalorder %v264, 2
    %vm285 = vcmp.lt.s32.totalorder %v264, 3
    %vm286 = vcmp.lt.s32.totalorder %v264, 4
    %v287 = vsel %vm283, %v267, %v270
    %v288 = vsel %vm286, %v276, 2102212464
    %v289 = vsel %vm285, %v273, %v288
    %v290 = vsel %vm284, %v287, %v289
    %v291 = vsel %vm283, %v270, %v273
    %v292 = vsel %vm286, %v279, 920167782
    %v293 = vsel %vm285, %v276, %v292
    %v294 = vsel %vm284, %v291, %v293
    %v295 = vsel %vm283, %v273, %v276
    %v296 = vsel %vm286, %v282, 1326507024
    %v297 = vsel %vm285, %v279, %v296
    %v298 = vsel %vm284, %v295, %v297
    %v299 = vshll.u32 %v259, 8
    %v300 = vmul.u32.u64.compose %v299, %v298
    %v301 = vextract.low.u32 %v300
    %v302 = vextract.high.u32 %v300
    %v303 = vmul.u32.u64.compose %v299, %v294
    %v304 = vextract.low.u32 %v303
    %v305 = vextract.high.u32 %v303
    %v306 = vmul.u32 %v299, %v290
    %v307 = vadd.s32 %v302, %v304
    %vm308 = vc.u32 %v302, %v304
    %v309 = vadd.s32 %v305, 1
    %v310 = vsel %vm308, %v309, %v305
    %v311 = vadd.s32 %v306, %v310
    %v312 = vadd.s32 %v311, 536870912
    %v313 = vshrl.u32 %v312, 30
    %v314 = vshll.u32 %v313, 30
    %v315 = vsub.s32 %v311, %v314
    %vm316 = vcmp.lt.s32.totalorder %v315, 0
    %v317 = vsub.s32 0, %v315
    %v318 = vsel %vm316, %v317, %v315
    %v319 = vclz %v318
    %v320 = vsub.s32 %v319, 2
    %vm321 = vcmp.gt.s32.totalorder 0, %v320
    %v322 = vsel %vm321, 0, %v320
    %v323 = vsub.s32 32, %v322
    %v324 = vshll.u32 %v315, %v322
    %v325 = vshrl.u32 %v307, %v323
    %v326 = vor.u32 %v324, %v325
    %v327 = vsub.s32 4294967266, %v322
    %v328 = vadd.s32 %v327, 127
    %v329 = vshll.u32 %v328, 23
    %v330 = vor.u32 4788187, %v329
    %v331 = vand.u32 2147483647, %v330
    %v333 = vcvt.s32.f32 %v326
    %v334 = vmul.f32 %v333, %v331
    %v335 = vxor.u32 %v334, 2147483648
    %v336 = vsel %vm253, %v335, %v334
    %v337 = vsub.s32 4, %v313
    %v338 = vsel %vm253, %v337, %v313
    %v339 = vsel %vm252, %v247, %v336
    %v340 = vsel %vm252, 0, %v338
    %v341 = vcosq.f32.pop %v339
    %v342 = vsinq.f32.pop %v339
    %vm343 = vweird.f32 %v247
    %v344 = vadd.s32 %v340, 3
    %v345 = vand.u32 %v344, 3
    %vm346 = vcmp.lt.s32.totalorder %v345, 2
    %vm347 = vcmp.eq.s32.totalorder %v345, 0
    %v348 = vxor.u32 %v342, 2147483648
    %v349 = vsel %vm347, %v341, %v348
    %vm350 = vcmp.eq.s32.totalorder %v345, 2
    %v351 = vxor.u32 %v341, 2147483648
    %v352 = vsel %vm350, %v351, %v342
    %v353 = vsel %vm346, %v349, %v352
    %v354 = vsel %vm343, nan, %v353
    %v355 = vmul.f32 %v354, %v250
    %v356 = vand.u32 2147483647, %v247
    %vm357 = vcmp.le.f32.partialorder %v356, 0.7853982
    %vm358 = vcmp.lt.s32.totalorder %v247, 0
    %v359 = vand.u32 %v247, 2139095040
    %v360 = vshrl.u32 %v359, 23
    %v361 = vsub.s32 %v360, 127
    %v362 = vand.u32 2147483647, %v247
    %v363 = vand.u32 %v362, 8388607
    %v364 = vor.u32 %v363, 8388608
    %v365 = vsub.s32 0, %v364
    %v366 = vadd.s32 %v361, 1
    %vm367 = vcmp.gt.s32.totalorder %v366, 0
    %v368 = vsel %vm367, %v366, 0
    %v369 = vshrl.u32 %v368, 5
    %v370 = vand.u32 %v368, 31
    %v371 = vsub.s32 32, %v370
    %v372 = vshrl.u32 683565275, %v371
    %v373 = vshll.u32 683565275, %v370
    %v374 = vshrl.u32 2475754826, %v371
    %v375 = vor.u32 %v373, %v374
    %v376 = vshll.u32 2475754826, %v370
    %v377 = vshrl.u32 2131351028, %v371
    %v378 = vor.u32 %v376, %v377
    %v379 = vshll.u32 2131351028, %v370
    %v380 = vshrl.u32 2102212464, %v371
    %v381 = vor.u32 %v379, %v380
    %v382 = vshll.u32 2102212464, %v370
    %v383 = vshrl.u32 920167782, %v371
    %v384 = vor.u32 %v382, %v383
    %v385 = vshll.u32 920167782, %v370
    %v386 = vshrl.u32 1326507024, %v371
    %v387 = vor.u32 %v385, %v386
    %vm388 = vcmp.lt.s32.totalorder %v369, 1
    %vm389 = vcmp.lt.s32.totalorder %v369, 2
    %vm390 = vcmp.lt.s32.totalorder %v369, 3
    %vm391 = vcmp.lt.s32.totalorder %v369, 4
    %v392 = vsel %vm388, %v372, %v375
    %v393 = vsel %vm391, %v381, 2102212464
    %v394 = vsel %vm390, %v378, %v393
    %v395 = vsel %vm389, %v392, %v394
    %v396 = vsel %vm388, %v375, %v378
    %v397 = vsel %vm391, %v384, 920167782
    %v398 = vsel %vm390, %v381, %v397
    %v399 = vsel %vm389, %v396, %v398
    %v400 = vsel %vm388, %v378, %v381
    %v401 = vsel %vm391, %v387, 1326507024
    %v402 = vsel %vm390, %v384, %v401
    %v403 = vsel %vm389, %v400, %v402
    %v404 = vshll.u32 %v364, 8
    %v405 = vmul.u32.u64.compose %v404, %v403
    %v406 = vextract.low.u32 %v405
    %v407 = vextract.high.u32 %v405
    %v408 = vmul.u32.u64.compose %v404, %v399
    %v409 = vextract.low.u32 %v408
    %v410 = vextract.high.u32 %v408
    %v411 = vmul.u32 %v404, %v395
    %v412 = vadd.s32 %v407, %v409
    %vm413 = vc.u32 %v407, %v409
    %v414 = vadd.s32 %v410, 1
    %v415 = vsel %vm413, %v414, %v410
    %v416 = vadd.s32 %v411, %v415
    %v417 = vadd.s32 %v416, 536870912
    %v418 = vshrl.u32 %v417, 30
    %v419 = vshll.u32 %v418, 30
    %v420 = vsub.s32 %v416, %v419
    %vm421 = vcmp.lt.s32.totalorder %v420, 0
    %v422 = vsub.s32 0, %v420
    %v423 = vsel %vm421, %v422, %v420
    %v424 = vclz %v423
    %v425 = vsub.s32 %v424, 2
    %vm426 = vcmp.gt.s32.totalorder 0, %v425
    %v427 = vsel %vm426, 0, %v425
    %v428 = vsub.s32 32, %v427
    %v429 = vshll.u32 %v420, %v427
    %v430 = vshrl.u32 %v412, %v428
    %v431 = vor.u32 %v429, %v430
    %v432 = vsub.s32 4294967266, %v427
    %v433 = vadd.s32 %v432, 127
    %v434 = vshll.u32 %v433, 23
    %v435 = vor.u32 4788187, %v434
    %v436 = vand.u32 2147483647, %v435
    %v438 = vcvt.s32.f32 %v431
    %v439 = vmul.f32 %v438, %v436
    %v440 = vxor.u32 %v439, 2147483648
    %v441 = vsel %vm358, %v440, %v439
    %v442 = vsub.s32 4, %v418
    %v443 = vsel %vm358, %v442, %v418
    %v444 = vsel %vm357, %v247, %v441
    %v445 = vsel %vm357, 0, %v443
    %v446 = vcosq.f32.pop %v444
    %v447 = vsinq.f32.pop %v444
    %vm448 = vweird.f32 %v247
    %v449 = vand.u32 %v445, 3
    %vm450 = vcmp.lt.s32.totalorder %v449, 2
    %vm451 = vcmp.eq.s32.totalorder %v449, 0
    %v452 = vxor.u32 %v447, 2147483648
    %v453 = vsel %vm451, %v446, %v452
    %vm454 = vcmp.eq.s32.totalorder %v449, 2
    %v455 = vxor.u32 %v446, 2147483648
    %v456 = vsel %vm454, %v455, %v447
    %v457 = vsel %vm450, %v453, %v456
    %v458 = vsel %vm448, nan, %v457
    %v459 = vmul.f32 %v458, %v250
    %460 = vst [vmem:[#allocation4 + $0xc] sm:$0x7] %v355
    %461 = vst [vmem:[#allocation4 + $0xf] sm:$0x7] %v459
    %462 = vst [vmem:[#allocation4 + $0xf] sm:$0x38] %v355
    %463 = vst [vmem:[#allocation4 + $0x12] sm:$0x38] %v459
    %v464 = vmul.f32 %v30, 16.0
    %v465 = vmul.f32 %v31, 256.0
    %v466 = vmul.f32 %v465, 1.442695
    %v467 = vpow.pop %v466
    %v468 = vand.u32 2147483647, %v464
    %vm469 = vcmp.le.f32.partialorder %v468, 0.7853982
    %vm470 = vcmp.lt.s32.totalorder %v464, 0
    %v471 = vand.u32 %v464, 2139095040
    %v472 = vshrl.u32 %v471, 23
    %v473 = vsub.s32 %v472, 127
    %v474 = vand.u32 2147483647, %v464
    %v475 = vand.u32 %v474, 8388607
    %v476 = vor.u32 %v475, 8388608
    %v477 = vsub.s32 0, %v476
    %v478 = vadd.s32 %v473, 1
    %vm479 = vcmp.gt.s32.totalorder %v478, 0
    %v480 = vsel %vm479, %v478, 0
    %v481 = vshrl.u32 %v480, 5
    %v482 = vand.u32 %v480, 31
    %v483 = vsub.s32 32, %v482
    %v484 = vshrl.u32 683565275, %v483
    %v485 = vshll.u32 683565275, %v482
    %v486 = vshrl.u32 2475754826, %v483
    %v487 = vor.u32 %v485, %v486
    %v488 = vshll.u32 2475754826, %v482
    %v489 = vshrl.u32 2131351028, %v483
    %v490 = vor.u32 %v488, %v489
    %v491 = vshll.u32 2131351028, %v482
    %v492 = vshrl.u32 2102212464, %v483
    %v493 = vor.u32 %v491, %v492
    %v494 = vshll.u32 2102212464, %v482
    %v495 = vshrl.u32 920167782, %v483
    %v496 = vor.u32 %v494, %v495
    %v497 = vshll.u32 920167782, %v482
    %v498 = vshrl.u32 1326507024, %v483
    %v499 = vor.u32 %v497, %v498
    %vm500 = vcmp.lt.s32.totalorder %v481, 1
    %vm501 = vcmp.lt.s32.totalorder %v481, 2
    %vm502 = vcmp.lt.s32.totalorder %v481, 3
    %vm503 = vcmp.lt.s32.totalorder %v481, 4
    %v504 = vsel %vm500, %v484, %v487
    %v505 = vsel %vm503, %v493, 2102212464
    %v506 = vsel %vm502, %v490, %v505
    %v507 = vsel %vm501, %v504, %v506
    %v508 = vsel %vm500, %v487, %v490
    %v509 = vsel %vm503, %v496, 920167782
    %v510 = vsel %vm502, %v493, %v509
    %v511 = vsel %vm501, %v508, %v510
    %v512 = vsel %vm500, %v490, %v493
    %v513 = vsel %vm503, %v499, 1326507024
    %v514 = vsel %vm502, %v496, %v513
    %v515 = vsel %vm501, %v512, %v514
    %v516 = vshll.u32 %v476, 8
    %v517 = vmul.u32.u64.compose %v516, %v515
    %v518 = vextract.low.u32 %v517
    %v519 = vextract.high.u32 %v517
    %v520 = vmul.u32.u64.compose %v516, %v511
    %v521 = vextract.low.u32 %v520
    %v522 = vextract.high.u32 %v520
    %v523 = vmul.u32 %v516, %v507
    %v524 = vadd.s32 %v519, %v521
    %vm525 = vc.u32 %v519, %v521
    %v526 = vadd.s32 %v522, 1
    %v527 = vsel %vm525, %v526, %v522
    %v528 = vadd.s32 %v523, %v527
    %v529 = vadd.s32 %v528, 536870912
    %v530 = vshrl.u32 %v529, 30
    %v531 = vshll.u32 %v530, 30
    %v532 = vsub.s32 %v528, %v531
    %vm533 = vcmp.lt.s32.totalorder %v532, 0
    %v534 = vsub.s32 0, %v532
    %v535 = vsel %vm533, %v534, %v532
    %v536 = vclz %v535
    %v537 = vsub.s32 %v536, 2
    %vm538 = vcmp.gt.s32.totalorder 0, %v537
    %v539 = vsel %vm538, 0, %v537
    %v540 = vsub.s32 32, %v539
    %v541 = vshll.u32 %v532, %v539
    %v542 = vshrl.u32 %v524, %v540
    %v543 = vor.u32 %v541, %v542
    %v544 = vsub.s32 4294967266, %v539
    %v545 = vadd.s32 %v544, 127
    %v546 = vshll.u32 %v545, 23
    %v547 = vor.u32 4788187, %v546
    %v548 = vand.u32 2147483647, %v547
    %v550 = vcvt.s32.f32 %v543
    %v551 = vmul.f32 %v550, %v548
    %v552 = vxor.u32 %v551, 2147483648
    %v553 = vsel %vm470, %v552, %v551
    %v554 = vsub.s32 4, %v530
    %v555 = vsel %vm470, %v554, %v530
    %v556 = vsel %vm469, %v464, %v553
    %v557 = vsel %vm469, 0, %v555
    %v558 = vcosq.f32.pop %v556
    %v559 = vsinq.f32.pop %v556
    %vm560 = vweird.f32 %v464
    %v561 = vadd.s32 %v557, 3
    %v562 = vand.u32 %v561, 3
    %vm563 = vcmp.lt.s32.totalorder %v562, 2
    %vm564 = vcmp.eq.s32.totalorder %v562, 0
    %v565 = vxor.u32 %v559, 2147483648
    %v566 = vsel %vm564, %v558, %v565
    %vm567 = vcmp.eq.s32.totalorder %v562, 2
    %v568 = vxor.u32 %v558, 2147483648
    %v569 = vsel %vm567, %v568, %v559
    %v570 = vsel %vm563, %v566, %v569
    %v571 = vsel %vm560, nan, %v570
    %v572 = vmul.f32 %v571, %v467
    %v573 = vand.u32 2147483647, %v464
    %vm574 = vcmp.le.f32.partialorder %v573, 0.7853982
    %vm575 = vcmp.lt.s32.totalorder %v464, 0
    %v576 = vand.u32 %v464, 2139095040
    %v577 = vshrl.u32 %v576, 23
    %v578 = vsub.s32 %v577, 127
    %v579 = vand.u32 2147483647, %v464
    %v580 = vand.u32 %v579, 8388607
    %v581 = vor.u32 %v580, 8388608
    %v582 = vsub.s32 0, %v581
    %v583 = vadd.s32 %v578, 1
    %vm584 = vcmp.gt.s32.totalorder %v583, 0
    %v585 = vsel %vm584, %v583, 0
    %v586 = vshrl.u32 %v585, 5
    %v587 = vand.u32 %v585, 31
    %v588 = vsub.s32 32, %v587
    %v589 = vshrl.u32 683565275, %v588
    %v590 = vshll.u32 683565275, %v587
    %v591 = vshrl.u32 2475754826, %v588
    %v592 = vor.u32 %v590, %v591
    %v593 = vshll.u32 2475754826, %v587
    %v594 = vshrl.u32 2131351028, %v588
    %v595 = vor.u32 %v593, %v594
    %v596 = vshll.u32 2131351028, %v587
    %v597 = vshrl.u32 2102212464, %v588
    %v598 = vor.u32 %v596, %v597
    %v599 = vshll.u32 2102212464, %v587
    %v600 = vshrl.u32 920167782, %v588
    %v601 = vor.u32 %v599, %v600
    %v602 = vshll.u32 920167782, %v587
    %v603 = vshrl.u32 1326507024, %v588
    %v604 = vor.u32 %v602, %v603
    %vm605 = vcmp.lt.s32.totalorder %v586, 1
    %vm606 = vcmp.lt.s32.totalorder %v586, 2
    %vm607 = vcmp.lt.s32.totalorder %v586, 3
    %vm608 = vcmp.lt.s32.totalorder %v586, 4
    %v609 = vsel %vm605, %v589, %v592
    %v610 = vsel %vm608, %v598, 2102212464
    %v611 = vsel %vm607, %v595, %v610
    %v612 = vsel %vm606, %v609, %v611
    %v613 = vsel %vm605, %v592, %v595
    %v614 = vsel %vm608, %v601, 920167782
    %v615 = vsel %vm607, %v598, %v614
    %v616 = vsel %vm606, %v613, %v615
    %v617 = vsel %vm605, %v595, %v598
    %v618 = vsel %vm608, %v604, 1326507024
    %v619 = vsel %vm607, %v601, %v618
    %v620 = vsel %vm606, %v617, %v619
    %v621 = vshll.u32 %v581, 8
    %v622 = vmul.u32.u64.compose %v621, %v620
    %v623 = vextract.low.u32 %v622
    %v624 = vextract.high.u32 %v622
    %v625 = vmul.u32.u64.compose %v621, %v616
    %v626 = vextract.low.u32 %v625
    %v627 = vextract.high.u32 %v625
    %v628 = vmul.u32 %v621, %v612
    %v629 = vadd.s32 %v624, %v626
    %vm630 = vc.u32 %v624, %v626
    %v631 = vadd.s32 %v627, 1
    %v632 = vsel %vm630, %v631, %v627
    %v633 = vadd.s32 %v628, %v632
    %v634 = vadd.s32 %v633, 536870912
    %v635 = vshrl.u32 %v634, 30
    %v636 = vshll.u32 %v635, 30
    %v637 = vsub.s32 %v633, %v636
    %vm638 = vcmp.lt.s32.totalorder %v637, 0
    %v639 = vsub.s32 0, %v637
    %v640 = vsel %vm638, %v639, %v637
    %v641 = vclz %v640
    %v642 = vsub.s32 %v641, 2
    %vm643 = vcmp.gt.s32.totalorder 0, %v642
    %v644 = vsel %vm643, 0, %v642
    %v645 = vsub.s32 32, %v644
    %v646 = vshll.u32 %v637, %v644
    %v647 = vshrl.u32 %v629, %v645
    %v648 = vor.u32 %v646, %v647
    %v649 = vsub.s32 4294967266, %v644
    %v650 = vadd.s32 %v649, 127
    %v651 = vshll.u32 %v650, 23
    %v652 = vor.u32 4788187, %v651
    %v653 = vand.u32 2147483647, %v652
    %v655 = vcvt.s32.f32 %v648
    %v656 = vmul.f32 %v655, %v653
    %v657 = vxor.u32 %v656, 2147483648
    %v658 = vsel %vm575, %v657, %v656
    %v659 = vsub.s32 4, %v635
    %v660 = vsel %vm575, %v659, %v635
    %v661 = vsel %vm574, %v464, %v658
    %v662 = vsel %vm574, 0, %v660
    %v663 = vcosq.f32.pop %v661
    %v664 = vsinq.f32.pop %v661
    %vm665 = vweird.f32 %v464
    %v666 = vand.u32 %v662, 3
    %vm667 = vcmp.lt.s32.totalorder %v666, 2
    %vm668 = vcmp.eq.s32.totalorder %v666, 0
    %v669 = vxor.u32 %v664, 2147483648
    %v670 = vsel %vm668, %v663, %v669
    %vm671 = vcmp.eq.s32.totalorder %v666, 2
    %v672 = vxor.u32 %v663, 2147483648
    %v673 = vsel %vm671, %v672, %v664
    %v674 = vsel %vm667, %v670, %v673
    %v675 = vsel %vm665, nan, %v674
    %v676 = vmul.f32 %v675, %v467
    %677 = vst [vmem:[#allocation4 + $0x18] sm:$0x7] %v572
    %678 = vst [vmem:[#allocation4 + $0x1b] sm:$0x7] %v676
    %679 = vst [vmem:[#allocation4 + $0x1b] sm:$0x38] %v572
    %680 = vst [vmem:[#allocation4 + $0x1e] sm:$0x38] %v676
    %v681 = vmul.f32 %v30, 64.0
    %v682 = vmul.f32 %v31, 4096.0
    %v683 = vmul.f32 %v682, 1.442695
    %v684 = vpow.pop %v683
    %v685 = vand.u32 2147483647, %v681
    %vm686 = vcmp.le.f32.partialorder %v685, 0.7853982
    %vm687 = vcmp.lt.s32.totalorder %v681, 0
    %v688 = vand.u32 %v681, 2139095040
    %v689 = vshrl.u32 %v688, 23
    %v690 = vsub.s32 %v689, 127
    %v691 = vand.u32 2147483647, %v681
    %v692 = vand.u32 %v691, 8388607
    %v693 = vor.u32 %v692, 8388608
    %v694 = vsub.s32 0, %v693
    %v695 = vadd.s32 %v690, 1
    %vm696 = vcmp.gt.s32.totalorder %v695, 0
    %v697 = vsel %vm696, %v695, 0
    %v698 = vshrl.u32 %v697, 5
    %v699 = vand.u32 %v697, 31
    %v700 = vsub.s32 32, %v699
    %v701 = vshrl.u32 683565275, %v700
    %v702 = vshll.u32 683565275, %v699
    %v703 = vshrl.u32 2475754826, %v700
    %v704 = vor.u32 %v702, %v703
    %v705 = vshll.u32 2475754826, %v699
    %v706 = vshrl.u32 2131351028, %v700
    %v707 = vor.u32 %v705, %v706
    %v708 = vshll.u32 2131351028, %v699
    %v709 = vshrl.u32 2102212464, %v700
    %v710 = vor.u32 %v708, %v709
    %v711 = vshll.u32 2102212464, %v699
    %v712 = vshrl.u32 920167782, %v700
    %v713 = vor.u32 %v711, %v712
    %v714 = vshll.u32 920167782, %v699
    %v715 = vshrl.u32 1326507024, %v700
    %v716 = vor.u32 %v714, %v715
    %vm717 = vcmp.lt.s32.totalorder %v698, 1
    %vm718 = vcmp.lt.s32.totalorder %v698, 2
    %vm719 = vcmp.lt.s32.totalorder %v698, 3
    %vm720 = vcmp.lt.s32.totalorder %v698, 4
    %v721 = vsel %vm717, %v701, %v704
    %v722 = vsel %vm720, %v710, 2102212464
    %v723 = vsel %vm719, %v707, %v722
    %v724 = vsel %vm718, %v721, %v723
    %v725 = vsel %vm717, %v704, %v707
    %v726 = vsel %vm720, %v713, 920167782
    %v727 = vsel %vm719, %v710, %v726
    %v728 = vsel %vm718, %v725, %v727
    %v729 = vsel %vm717, %v707, %v710
    %v730 = vsel %vm720, %v716, 1326507024
    %v731 = vsel %vm719, %v713, %v730
    %v732 = vsel %vm718, %v729, %v731
    %v733 = vshll.u32 %v693, 8
    %v734 = vmul.u32.u64.compose %v733, %v732
    %v735 = vextract.low.u32 %v734
    %v736 = vextract.high.u32 %v734
    %v737 = vmul.u32.u64.compose %v733, %v728
    %v738 = vextract.low.u32 %v737
    %v739 = vextract.high.u32 %v737
    %v740 = vmul.u32 %v733, %v724
    %v741 = vadd.s32 %v736, %v738
    %vm742 = vc.u32 %v736, %v738
    %v743 = vadd.s32 %v739, 1
    %v744 = vsel %vm742, %v743, %v739
    %v745 = vadd.s32 %v740, %v744
    %v746 = vadd.s32 %v745, 536870912
    %v747 = vshrl.u32 %v746, 30
    %v748 = vshll.u32 %v747, 30
    %v749 = vsub.s32 %v745, %v748
    %vm750 = vcmp.lt.s32.totalorder %v749, 0
    %v751 = vsub.s32 0, %v749
    %v752 = vsel %vm750, %v751, %v749
    %v753 = vclz %v752
    %v754 = vsub.s32 %v753, 2
    %vm755 = vcmp.gt.s32.totalorder 0, %v754
    %v756 = vsel %vm755, 0, %v754
    %v757 = vsub.s32 32, %v756
    %v758 = vshll.u32 %v749, %v756
    %v759 = vshrl.u32 %v741, %v757
    %v760 = vor.u32 %v758, %v759
    %v761 = vsub.s32 4294967266, %v756
    %v762 = vadd.s32 %v761, 127
    %v763 = vshll.u32 %v762, 23
    %v764 = vor.u32 4788187, %v763
    %v765 = vand.u32 2147483647, %v764
    %v767 = vcvt.s32.f32 %v760
    %v768 = vmul.f32 %v767, %v765
    %v769 = vxor.u32 %v768, 2147483648
    %v770 = vsel %vm687, %v769, %v768
    %v771 = vsub.s32 4, %v747
    %v772 = vsel %vm687, %v771, %v747
    %v773 = vsel %vm686, %v681, %v770
    %v774 = vsel %vm686, 0, %v772
    %v775 = vcosq.f32.pop %v773
    %v776 = vsinq.f32.pop %v773
    %vm777 = vweird.f32 %v681
    %v778 = vadd.s32 %v774, 3
    %v779 = vand.u32 %v778, 3
    %vm780 = vcmp.lt.s32.totalorder %v779, 2
    %vm781 = vcmp.eq.s32.totalorder %v779, 0
    %v782 = vxor.u32 %v776, 2147483648
    %v783 = vsel %vm781, %v775, %v782
    %vm784 = vcmp.eq.s32.totalorder %v779, 2
    %v785 = vxor.u32 %v775, 2147483648
    %v786 = vsel %vm784, %v785, %v776
    %v787 = vsel %vm780, %v783, %v786
    %v788 = vsel %vm777, nan, %v787
    %v789 = vmul.f32 %v788, %v684
    %v790 = vand.u32 2147483647, %v681
    %vm791 = vcmp.le.f32.partialorder %v790, 0.7853982
    %vm792 = vcmp.lt.s32.totalorder %v681, 0
    %v793 = vand.u32 %v681, 2139095040
    %v794 = vshrl.u32 %v793, 23
    %v795 = vsub.s32 %v794, 127
    %v796 = vand.u32 2147483647, %v681
    %v797 = vand.u32 %v796, 8388607
    %v798 = vor.u32 %v797, 8388608
    %v799 = vsub.s32 0, %v798
    %v800 = vadd.s32 %v795, 1
    %vm801 = vcmp.gt.s32.totalorder %v800, 0
    %v802 = vsel %vm801, %v800, 0
    %v803 = vshrl.u32 %v802, 5
    %v804 = vand.u32 %v802, 31
    %v805 = vsub.s32 32, %v804
    %v806 = vshrl.u32 683565275, %v805
    %v807 = vshll.u32 683565275, %v804
    %v808 = vshrl.u32 2475754826, %v805
    %v809 = vor.u32 %v807, %v808
    %v810 = vshll.u32 2475754826, %v804
    %v811 = vshrl.u32 2131351028, %v805
    %v812 = vor.u32 %v810, %v811
    %v813 = vshll.u32 2131351028, %v804
    %v814 = vshrl.u32 2102212464, %v805
    %v815 = vor.u32 %v813, %v814
    %v816 = vshll.u32 2102212464, %v804
    %v817 = vshrl.u32 920167782, %v805
    %v818 = vor.u32 %v816, %v817
    %v819 = vshll.u32 920167782, %v804
    %v820 = vshrl.u32 1326507024, %v805
    %v821 = vor.u32 %v819, %v820
    %vm822 = vcmp.lt.s32.totalorder %v803, 1
    %vm823 = vcmp.lt.s32.totalorder %v803, 2
    %vm824 = vcmp.lt.s32.totalorder %v803, 3
    %vm825 = vcmp.lt.s32.totalorder %v803, 4
    %v826 = vsel %vm822, %v806, %v809
    %v827 = vsel %vm825, %v815, 2102212464
    %v828 = vsel %vm824, %v812, %v827
    %v829 = vsel %vm823, %v826, %v828
    %v830 = vsel %vm822, %v809, %v812
    %v831 = vsel %vm825, %v818, 920167782
    %v832 = vsel %vm824, %v815, %v831
    %v833 = vsel %vm823, %v830, %v832
    %v834 = vsel %vm822, %v812, %v815
    %v835 = vsel %vm825, %v821, 1326507024
    %v836 = vsel %vm824, %v818, %v835
    %v837 = vsel %vm823, %v834, %v836
    %v838 = vshll.u32 %v798, 8
    %v839 = vmul.u32.u64.compose %v838, %v837
    %v840 = vextract.low.u32 %v839
    %v841 = vextract.high.u32 %v839
    %v842 = vmul.u32.u64.compose %v838, %v833
    %v843 = vextract.low.u32 %v842
    %v844 = vextract.high.u32 %v842
    %v845 = vmul.u32 %v838, %v829
    %v846 = vadd.s32 %v841, %v843
    %vm847 = vc.u32 %v841, %v843
    %v848 = vadd.s32 %v844, 1
    %v849 = vsel %vm847, %v848, %v844
    %v850 = vadd.s32 %v845, %v849
    %v851 = vadd.s32 %v850, 536870912
    %v852 = vshrl.u32 %v851, 30
    %v853 = vshll.u32 %v852, 30
    %v854 = vsub.s32 %v850, %v853
    %vm855 = vcmp.lt.s32.totalorder %v854, 0
    %v856 = vsub.s32 0, %v854
    %v857 = vsel %vm855, %v856, %v854
    %v858 = vclz %v857
    %v859 = vsub.s32 %v858, 2
    %vm860 = vcmp.gt.s32.totalorder 0, %v859
    %v861 = vsel %vm860, 0, %v859
    %v862 = vsub.s32 32, %v861
    %v863 = vshll.u32 %v854, %v861
    %v864 = vshrl.u32 %v846, %v862
    %v865 = vor.u32 %v863, %v864
    %v866 = vsub.s32 4294967266, %v861
    %v867 = vadd.s32 %v866, 127
    %v868 = vshll.u32 %v867, 23
    %v869 = vor.u32 4788187, %v868
    %v870 = vand.u32 2147483647, %v869
    %v872 = vcvt.s32.f32 %v865
    %v873 = vmul.f32 %v872, %v870
    %v874 = vxor.u32 %v873, 2147483648
    %v875 = vsel %vm792, %v874, %v873
    %v876 = vsub.s32 4, %v852
    %v877 = vsel %vm792, %v876, %v852
    %v878 = vsel %vm791, %v681, %v875
    %v879 = vsel %vm791, 0, %v877
    %v880 = vcosq.f32.pop %v878
    %v881 = vsinq.f32.pop %v878
    %vm882 = vweird.f32 %v681
    %v883 = vand.u32 %v879, 3
    %vm884 = vcmp.lt.s32.totalorder %v883, 2
    %vm885 = vcmp.eq.s32.totalorder %v883, 0
    %v886 = vxor.u32 %v881, 2147483648
    %v887 = vsel %vm885, %v880, %v886
    %vm888 = vcmp.eq.s32.totalorder %v883, 2
    %v889 = vxor.u32 %v880, 2147483648
    %v890 = vsel %vm888, %v889, %v881
    %v891 = vsel %vm884, %v887, %v890
    %v892 = vsel %vm882, nan, %v891
    %v893 = vmul.f32 %v892, %v684
    %894 = vst [vmem:[#allocation4 + $0x24] sm:$0x7] %v789
    %895 = vst [vmem:[#allocation4 + $0x27] sm:$0x7] %v893
    %896 = vst [vmem:[#allocation4 + $0x27] sm:$0x38] %v789
    %897 = vst [vmem:[#allocation4 + $0x2a] sm:$0x38] %v893
    %v898 = vmul.f32 %v30, 256.0
    %v899 = vmul.f32 %v31, 65536.0
    %v900 = vmul.f32 %v899, 1.442695
    %v901 = vpow.pop %v900
    %v902 = vand.u32 2147483647, %v898
    %vm903 = vcmp.le.f32.partialorder %v902, 0.7853982
    %vm904 = vcmp.lt.s32.totalorder %v898, 0
    %v905 = vand.u32 %v898, 2139095040
    %v906 = vshrl.u32 %v905, 23
    %v907 = vsub.s32 %v906, 127
    %v908 = vand.u32 2147483647, %v898
    %v909 = vand.u32 %v908, 8388607
    %v910 = vor.u32 %v909, 8388608
    %v911 = vsub.s32 0, %v910
    %v912 = vadd.s32 %v907, 1
    %vm913 = vcmp.gt.s32.totalorder %v912, 0
    %v914 = vsel %vm913, %v912, 0
    %v915 = vshrl.u32 %v914, 5
    %v916 = vand.u32 %v914, 31
    %v917 = vsub.s32 32, %v916
    %v918 = vshrl.u32 683565275, %v917
    %v919 = vshll.u32 683565275, %v916
    %v920 = vshrl.u32 2475754826, %v917
    %v921 = vor.u32 %v919, %v920
    %v922 = vshll.u32 2475754826, %v916
    %v923 = vshrl.u32 2131351028, %v917
    %v924 = vor.u32 %v922, %v923
    %v925 = vshll.u32 2131351028, %v916
    %v926 = vshrl.u32 2102212464, %v917
    %v927 = vor.u32 %v925, %v926
    %v928 = vshll.u32 2102212464, %v916
    %v929 = vshrl.u32 920167782, %v917
    %v930 = vor.u32 %v928, %v929
    %v931 = vshll.u32 920167782, %v916
    %v932 = vshrl.u32 1326507024, %v917
    %v933 = vor.u32 %v931, %v932
    %vm934 = vcmp.lt.s32.totalorder %v915, 1
    %vm935 = vcmp.lt.s32.totalorder %v915, 2
    %vm936 = vcmp.lt.s32.totalorder %v915, 3
    %vm937 = vcmp.lt.s32.totalorder %v915, 4
    %v938 = vsel %vm934, %v918, %v921
    %v939 = vsel %vm937, %v927, 2102212464
    %v940 = vsel %vm936, %v924, %v939
    %v941 = vsel %vm935, %v938, %v940
    %v942 = vsel %vm934, %v921, %v924
    %v943 = vsel %vm937, %v930, 920167782
    %v944 = vsel %vm936, %v927, %v943
    %v945 = vsel %vm935, %v942, %v944
    %v946 = vsel %vm934, %v924, %v927
    %v947 = vsel %vm937, %v933, 1326507024
    %v948 = vsel %vm936, %v930, %v947
    %v949 = vsel %vm935, %v946, %v948
    %v950 = vshll.u32 %v910, 8
    %v951 = vmul.u32.u64.compose %v950, %v949
    %v952 = vextract.low.u32 %v951
    %v953 = vextract.high.u32 %v951
    %v954 = vmul.u32.u64.compose %v950, %v945
    %v955 = vextract.low.u32 %v954
    %v956 = vextract.high.u32 %v954
    %v957 = vmul.u32 %v950, %v941
    %v958 = vadd.s32 %v953, %v955
    %vm959 = vc.u32 %v953, %v955
    %v960 = vadd.s32 %v956, 1
    %v961 = vsel %vm959, %v960, %v956
    %v962 = vadd.s32 %v957, %v961
    %v963 = vadd.s32 %v962, 536870912
    %v964 = vshrl.u32 %v963, 30
    %v965 = vshll.u32 %v964, 30
    %v966 = vsub.s32 %v962, %v965
    %vm967 = vcmp.lt.s32.totalorder %v966, 0
    %v968 = vsub.s32 0, %v966
    %v969 = vsel %vm967, %v968, %v966
    %v970 = vclz %v969
    %v971 = vsub.s32 %v970, 2
    %vm972 = vcmp.gt.s32.totalorder 0, %v971
    %v973 = vsel %vm972, 0, %v971
    %v974 = vsub.s32 32, %v973
    %v975 = vshll.u32 %v966, %v973
    %v976 = vshrl.u32 %v958, %v974
    %v977 = vor.u32 %v975, %v976
    %v978 = vsub.s32 4294967266, %v973
    %v979 = vadd.s32 %v978, 127
    %v980 = vshll.u32 %v979, 23
    %v981 = vor.u32 4788187, %v980
    %v982 = vand.u32 2147483647, %v981
    %v984 = vcvt.s32.f32 %v977
    %v985 = vmul.f32 %v984, %v982
    %v986 = vxor.u32 %v985, 2147483648
    %v987 = vsel %vm904, %v986, %v985
    %v988 = vsub.s32 4, %v964
    %v989 = vsel %vm904, %v988, %v964
    %v990 = vsel %vm903, %v898, %v987
    %v991 = vsel %vm903, 0, %v989
    %v992 = vcosq.f32.pop %v990
    %v993 = vsinq.f32.pop %v990
    %vm994 = vweird.f32 %v898
    %v995 = vadd.s32 %v991, 3
    %v996 = vand.u32 %v995, 3
    %vm997 = vcmp.lt.s32.totalorder %v996, 2
    %vm998 = vcmp.eq.s32.totalorder %v996, 0
    %v999 = vxor.u32 %v993, 2147483648
    %v1000 = vsel %vm998, %v992, %v999
    %vm1001 = vcmp.eq.s32.totalorder %v996, 2
    %v1002 = vxor.u32 %v992, 2147483648
    %v1003 = vsel %vm1001, %v1002, %v993
    %v1004 = vsel %vm997, %v1000, %v1003
    %v1005 = vsel %vm994, nan, %v1004
    %v1006 = vmul.f32 %v1005, %v901
    %v1007 = vand.u32 2147483647, %v898
    %vm1008 = vcmp.le.f32.partialorder %v1007, 0.7853982
    %vm1009 = vcmp.lt.s32.totalorder %v898, 0
    %v1010 = vand.u32 %v898, 2139095040
    %v1011 = vshrl.u32 %v1010, 23
    %v1012 = vsub.s32 %v1011, 127
    %v1013 = vand.u32 2147483647, %v898
    %v1014 = vand.u32 %v1013, 8388607
    %v1015 = vor.u32 %v1014, 8388608
    %v1016 = vsub.s32 0, %v1015
    %v1017 = vadd.s32 %v1012, 1
    %vm1018 = vcmp.gt.s32.totalorder %v1017, 0
    %v1019 = vsel %vm1018, %v1017, 0
    %v1020 = vshrl.u32 %v1019, 5
    %v1021 = vand.u32 %v1019, 31
    %v1022 = vsub.s32 32, %v1021
    %v1023 = vshrl.u32 683565275, %v1022
    %v1024 = vshll.u32 683565275, %v1021
    %v1025 = vshrl.u32 2475754826, %v1022
    %v1026 = vor.u32 %v1024, %v1025
    %v1027 = vshll.u32 2475754826, %v1021
    %v1028 = vshrl.u32 2131351028, %v1022
    %v1029 = vor.u32 %v1027, %v1028
    %v1030 = vshll.u32 2131351028, %v1021
    %v1031 = vshrl.u32 2102212464, %v1022
    %v1032 = vor.u32 %v1030, %v1031
    %v1033 = vshll.u32 2102212464, %v1021
    %v1034 = vshrl.u32 920167782, %v1022
    %v1035 = vor.u32 %v1033, %v1034
    %v1036 = vshll.u32 920167782, %v1021
    %v1037 = vshrl.u32 1326507024, %v1022
    %v1038 = vor.u32 %v1036, %v1037
    %vm1039 = vcmp.lt.s32.totalorder %v1020, 1
    %vm1040 = vcmp.lt.s32.totalorder %v1020, 2
    %vm1041 = vcmp.lt.s32.totalorder %v1020, 3
    %vm1042 = vcmp.lt.s32.totalorder %v1020, 4
    %v1043 = vsel %vm1039, %v1023, %v1026
    %v1044 = vsel %vm1042, %v1032, 2102212464
    %v1045 = vsel %vm1041, %v1029, %v1044
    %v1046 = vsel %vm1040, %v1043, %v1045
    %v1047 = vsel %vm1039, %v1026, %v1029
    %v1048 = vsel %vm1042, %v1035, 920167782
    %v1049 = vsel %vm1041, %v1032, %v1048
    %v1050 = vsel %vm1040, %v1047, %v1049
    %v1051 = vsel %vm1039, %v1029, %v1032
    %v1052 = vsel %vm1042, %v1038, 1326507024
    %v1053 = vsel %vm1041, %v1035, %v1052
    %v1054 = vsel %vm1040, %v1051, %v1053
    %v1055 = vshll.u32 %v1015, 8
    %v1056 = vmul.u32.u64.compose %v1055, %v1054
    %v1057 = vextract.low.u32 %v1056
    %v1058 = vextract.high.u32 %v1056
    %v1059 = vmul.u32.u64.compose %v1055, %v1050
    %v1060 = vextract.low.u32 %v1059
    %v1061 = vextract.high.u32 %v1059
    %v1062 = vmul.u32 %v1055, %v1046
    %v1063 = vadd.s32 %v1058, %v1060
    %vm1064 = vc.u32 %v1058, %v1060
    %v1065 = vadd.s32 %v1061, 1
    %v1066 = vsel %vm1064, %v1065, %v1061
    %v1067 = vadd.s32 %v1062, %v1066
    %v1068 = vadd.s32 %v1067, 536870912
    %v1069 = vshrl.u32 %v1068, 30
    %v1070 = vshll.u32 %v1069, 30
    %v1071 = vsub.s32 %v1067, %v1070
    %vm1072 = vcmp.lt.s32.totalorder %v1071, 0
    %v1073 = vsub.s32 0, %v1071
    %v1074 = vsel %vm1072, %v1073, %v1071
    %v1075 = vclz %v1074
    %v1076 = vsub.s32 %v1075, 2
    %vm1077 = vcmp.gt.s32.totalorder 0, %v1076
    %v1078 = vsel %vm1077, 0, %v1076
    %v1079 = vsub.s32 32, %v1078
    %v1080 = vshll.u32 %v1071, %v1078
    %v1081 = vshrl.u32 %v1063, %v1079
    %v1082 = vor.u32 %v1080, %v1081
    %v1083 = vsub.s32 4294967266, %v1078
    %v1084 = vadd.s32 %v1083, 127
    %v1085 = vshll.u32 %v1084, 23
    %v1086 = vor.u32 4788187, %v1085
    %v1087 = vand.u32 2147483647, %v1086
    %v1089 = vcvt.s32.f32 %v1082
    %v1090 = vmul.f32 %v1089, %v1087
    %v1091 = vxor.u32 %v1090, 2147483648
    %v1092 = vsel %vm1009, %v1091, %v1090
    %v1093 = vsub.s32 4, %v1069
    %v1094 = vsel %vm1009, %v1093, %v1069
    %v1095 = vsel %vm1008, %v898, %v1092
    %v1096 = vsel %vm1008, 0, %v1094
    %v1097 = vcosq.f32.pop %v1095
    %v1098 = vsinq.f32.pop %v1095
    %vm1099 = vweird.f32 %v898
    %v1100 = vand.u32 %v1096, 3
    %vm1101 = vcmp.lt.s32.totalorder %v1100, 2
    %vm1102 = vcmp.eq.s32.totalorder %v1100, 0
    %v1103 = vxor.u32 %v1098, 2147483648
    %v1104 = vsel %vm1102, %v1097, %v1103
    %vm1105 = vcmp.eq.s32.totalorder %v1100, 2
    %v1106 = vxor.u32 %v1097, 2147483648
    %v1107 = vsel %vm1105, %v1106, %v1098
    %v1108 = vsel %vm1101, %v1104, %v1107
    %v1109 = vsel %vm1099, nan, %v1108
    %v1110 = vmul.f32 %v1109, %v901
    %1111 = vst [vmem:[#allocation4 + $0x30] sm:$0x7] %v1006
    %1112 = vst [vmem:[#allocation4 + $0x33] sm:$0x7] %v1110
    %1113 = vst [vmem:[#allocation4 + $0x33] sm:$0x38] %v1006
    %1114 = vst [vmem:[#allocation4 + $0x36] sm:$0x38] %v1110
    %v1115 = vld [vmem:[#allocation4] sm:$0xff]
    %v1116 = vld [vmem:[#allocation4 + $0x8] sm:$0xff]
    %v1117 = vld [vmem:[#allocation4 + $0x10] sm:$0xff]
    %v1118 = vld [vmem:[#allocation4 + $0x18] sm:$0xff]
    %v1119 = vld [vmem:[#allocation4 + $0x20] sm:$0xff]
    %v1120 = vld [vmem:[#allocation4 + $0x28] sm:$0xff]
    %v1121 = vld [vmem:[#allocation4 + $0x30] sm:$0xff]
    %v1122 = vld [vmem:[#allocation4 + $0x38] sm:$0xff]
    %v1123 = vld [vmem:[#allocation4 + $0x40] sm:$0xff]
    %v1124 = vld [vmem:[#allocation4 + $0x48] sm:$0xff]
    %v1125 = vld [vmem:[#allocation4 + $0x50] sm:$0xff]
    %v1126 = vld [vmem:[#allocation4 + $0x58] sm:$0xff]
    %v1127 = vld [vmem:[#allocation4 + $0x60] sm:$0xff]
    %v1128 = vld [vmem:[#allocation4 + $0x68] sm:$0xff]
    %v1129 = vld [vmem:[#allocation4 + $0x70] sm:$0xff]
    %v1130 = vld [vmem:[#allocation4 + $0x78] sm:$0xff]
    %1131 = vxpose.xlu0.b32.start [1/16] %v1115, 128
    %1132 = vxpose.xlu0.b32.cont [2/16] %v1116, 128
    %1133 = vxpose.xlu0.b32.cont [3/16] %v1117, 128
    %1134 = vxpose.xlu0.b32.cont [4/16] %v1118, 128
    %1135 = vxpose.xlu0.b32.cont [5/16] %v1119, 128
    %1136 = vxpose.xlu0.b32.cont [6/16] %v1120, 128
    %1137 = vxpose.xlu0.b32.cont [7/16] %v1121, 128
    %1138 = vxpose.xlu0.b32.cont [8/16] %v1122, 128
    %1139 = vxpose.xlu0.b32.cont [9/16] %v1123, 128
    %1140 = vxpose.xlu0.b32.cont [10/16] %v1124, 128
    %1141 = vxpose.xlu0.b32.cont [11/16] %v1125, 128
    %1142 = vxpose.xlu0.b32.cont [12/16] %v1126, 128
    %1143 = vxpose.xlu0.b32.cont [13/16] %v1127, 128
    %1144 = vxpose.xlu0.b32.cont [14/16] %v1128, 128
    %1145 = vxpose.xlu0.b32.cont [15/16] %v1129, 128
    %1146 = vxpose.xlu0.b32.end [16/16] %v1130, 128
    %v1147 = vpop.trf.xlu0
    %v1148 = vpop.trf.xlu0
    %v1149 = vpop.trf.xlu0
    %v1150 = vpop.trf.xlu0
    %v1151 = vpop.trf.xlu0
    %v1152 = vpop.trf.xlu0
    %v1153 = vpop.trf.xlu0
    %v1154 = vpop.trf.xlu0
    %v1155 = vpop.trf.xlu0
    %v1156 = vpop.trf.xlu0
    %v1157 = vpop.trf.xlu0
    %v1158 = vpop.trf.xlu0
    %v1159 = vpop.trf.xlu0
    %v1160 = vpop.trf.xlu0
    %v1161 = vpop.trf.xlu0
    %v1162 = vpop.trf.xlu0
    %vm1163 = vcmask 490496
    %1164 = vst.msk [vmem:[#allocation5] sm:$0xff] %vm1163, %v1147
    %1165 = vst.msk [vmem:[#allocation5 + $0x8] sm:$0xff] %vm1163, %v1148
    %1166 = vst.msk [vmem:[#allocation5 + $0x10] sm:$0xff] %vm1163, %v1149
    %1167 = vst.msk [vmem:[#allocation5 + $0x18] sm:$0xff] %vm1163, %v1150
    %1168 = vst.msk [vmem:[#allocation5 + $0x20] sm:$0xff] %vm1163, %v1151
    %1169 = vst.msk [vmem:[#allocation5 + $0x28] sm:$0xff] %vm1163, %v1152
    %1170 = vst.msk [vmem:[#allocation5 + $0x30] sm:$0xff] %vm1163, %v1153
    %1171 = vst.msk [vmem:[#allocation5 + $0x38] sm:$0xff] %vm1163, %v1154
    %1172 = vst.msk [vmem:[#allocation5 + $0x40] sm:$0xff] %vm1163, %v1155
    %1173 = vst.msk [vmem:[#allocation5 + $0x48] sm:$0xff] %vm1163, %v1156
    %1174 = vst.msk [vmem:[#allocation5 + $0x50] sm:$0xff] %vm1163, %v1157
    %1175 = vst.msk [vmem:[#allocation5 + $0x58] sm:$0xff] %vm1163, %v1158
    %1176 = vst.msk [vmem:[#allocation5 + $0x60] sm:$0xff] %vm1163, %v1159
    %1177 = vst.msk [vmem:[#allocation5 + $0x68] sm:$0xff] %vm1163, %v1160
    %1178 = vst.msk [vmem:[#allocation5 + $0x70] sm:$0xff] %vm1163, %v1161
    %1179 = vst.msk [vmem:[#allocation5 + $0x78] sm:$0xff] %vm1163, %v1162
    // Predicated region
    $region10: #{tpu_custom_call.1} parent=1 // pred_check
      _
    $region11: #{tpu_custom_call.1} parent=1 // pred_check_branch
      %1181 = sbr.rel (0) target = $region13
    $region12: #{tpu_custom_call.1} parent=1 // pred_region
      %s1183 = ssub.s32 2048, 256
      %1184 = vsyncadd [#allocation6], %s1183
      %s1185 = sshll.u32 [#allocation5], 4
      %s1186 = int_to_ptr.vmem [resolvable:$true] %s1185
      %1191 = dma.vmem_to_hbm [thread:$0]  %s1186, 256, %s2, [#allocation6], 128, 128, 8
    $region13: #{tpu_custom_call.1} parent=1 // pred_fallthru
      _
    // Predicated region
    $region14: #{tpu_custom_call.1} parent=1 // pred_check
      _
    $region15: #{tpu_custom_call.1} parent=1 // pred_check_branch
      %1193 = sbr.rel (0) target = $region17
    $region16: #{tpu_custom_call.1} parent=1 // pred_region
      %1194 = dma.done [#allocation6], 2048
    $region17: #{tpu_custom_call.1} parent=1 // pred_fallthru
      _
    %1195 = vsyncpa [#allocation6], 1

</llo_original>
